<compile_context>
chip_gen: v5e
topology: v5e:2x2
jax: 0.10.0
libtpu: 0.0.40
codegen_flags: <defaults>
</compile_context>

<pallas_src>
import functools
import math

import jax
import jax.numpy as jnp
from jax.experimental import pallas as pl
from jax.experimental.pallas import tpu as pltpu

LANE = 128
SUBLANE = 8
CHUNK_ROWS = 64          # (64,128) inner slices; multiple of every packed sublane tile
NUM_SPLITS = 2           # leading "parallel" grid axis (one per TensorCore on v7x)
F32_BLOCK_ROWS = 4096    # ~2 MiB per input per buffer for f32


def _round_up(x, m):
    return -(-x // m) * m


def _pick_block_rows(itemsize):
    """Per-generation / per-dtype block size (rows of 128 lanes)."""
    rows = (F32_BLOCK_ROWS * 4) // max(int(itemsize), 1)   # keep ~2 MiB/step per input
    try:
        kind = jax.devices()[0].device_kind.lower()
        if "v7" in kind:
            rows *= 2   # 3.2 TB/s HBM: amortize the fixed per-step overhead harder
    except Exception:
        pass
    return _round_up(rows, CHUNK_ROWS)


def _dsc_sums_kernel(img_ref, tgt_ref, s_img_ref, s_tgt_ref, s_dot_ref, *,
                     rows_valid, block_rows, blocks_per_split, need_mask):
    """Accumulates sum(img), sum(target), sum(img*target) into one (8,128)
    f32 output slot per core-split.  Finalization happens in the wrapper."""
    c = pl.program_id(0)          # core-split index ("parallel")
    b = pl.program_id(1)          # block index within the split ("arbitrary")

    @pl.when(b == 0)
    def _init():
        s_img_ref[...] = jnp.zeros_like(s_img_ref)
        s_tgt_ref[...] = jnp.zeros_like(s_tgt_ref)
        s_dot_ref[...] = jnp.zeros_like(s_dot_ref)

    # Logical (unclamped) first row of this block; row indices stay well within int32.
    base_row = (c * blocks_per_split + b) * block_rows

    def accumulate(masked):
        n_chunks, rem = divmod(block_rows, CHUNK_ROWS)

        def chunk_sums(off, size, row_iota):
            x = img_ref[pl.ds(off, size), :].astype(jnp.float32)
            y = tgt_ref[pl.ds(off, size), :].astype(jnp.float32)
            if masked:
                valid = (base_row + off + row_iota) < rows_valid
                x = jnp.where(valid, x, 0.0)
                y = jnp.where(valid, y, 0.0)
            xr = x.reshape(size // SUBLANE, SUBLANE, LANE)
            yr = y.reshape(size // SUBLANE, SUBLANE, LANE)
            return (jnp.sum(xr, axis=0), jnp.sum(yr, axis=0),
                    jnp.sum(xr * yr, axis=0))

        zero = jnp.zeros((SUBLANE, LANE), jnp.float32)
        si, st, sd = zero, zero, zero

        if n_chunks > 0:
            iota_c = (jax.lax.broadcasted_iota(jnp.int32, (CHUNK_ROWS, LANE), 0)
                      if masked else None)

            def body(k, carry):
                ci, ct, cd = carry
                off = pl.multiple_of(k * CHUNK_ROWS, CHUNK_ROWS)
                di, dt, dd = chunk_sums(off, CHUNK_ROWS, iota_c)
                return ci + di, ct + dt, cd + dd

            si, st, sd = jax.lax.fori_loop(0, n_chunks, body, (si, st, sd),
                                           unroll=2)

        if rem:   # only when block_rows < CHUNK_ROWS (tiny inputs); rem % 8 == 0
            iota_r = (jax.lax.broadcasted_iota(jnp.int32, (rem, LANE), 0)
                      if masked else None)
            di, dt, dd = chunk_sums(n_chunks * CHUNK_ROWS, rem, iota_r)
            si, st, sd = si + di, st + dt, sd + dd

        s_img_ref[...] += si
        s_tgt_ref[...] += st
        s_dot_ref[...] += sd

    if need_mask:
        # Pay the row mask only on blocks that actually extend past the valid rows
        # (the ragged last data block and any fully-out-of-range logical block).
        is_ragged = base_row + block_rows > rows_valid

        @pl.when(jnp.logical_not(is_ragged))
        def _full():
            accumulate(False)

        @pl.when(is_ragged)
        def _tail():
            accumulate(True)
    else:
        accumulate(False)


def dsc_loss(img, target, smooth=1.0, *, block_rows=None):
    """Pallas implementation of DSC_loss.forward for [C, H, W] inputs."""
    assert img.shape == target.shape
    n = int(math.prod(img.shape))
    itemsize = img.dtype.itemsize

    img_flat = img.reshape(-1)
    tgt_flat = target.reshape(-1)
    if n % LANE != 0:
        # TODO(synk): for C*H*W % 128 != 0 this jnp.pad copies both inputs; a
        # manual-DMA (memory_space=pl.ANY) path would avoid the extra traffic.
        pad = LANE - (n % LANE)
        img_flat = jnp.pad(img_flat, (0, pad))
        tgt_flat = jnp.pad(tgt_flat, (0, pad))
    rows = img_flat.shape[0] // LANE          # ceil(n / 128) valid data rows
    img2d = img_flat.reshape(rows, LANE)      # free reshape: no cast, no pad copy
    tgt2d = tgt_flat.reshape(rows, LANE)

    sub_mult = max(SUBLANE, (SUBLANE * 4) // itemsize)   # 8 f32 / 16 bf16 / 32 int8
    arr_rows = rows
    if arr_rows < sub_mult:
        # Tiny input: pad a handful of zero rows so the single block is tile-aligned.
        extra = sub_mult - arr_rows
        img2d = jnp.pad(img2d, ((0, extra), (0, 0)))
        tgt2d = jnp.pad(tgt2d, ((0, extra), (0, 0)))
        arr_rows = sub_mult

    max_block = max(sub_mult, (arr_rows // sub_mult) * sub_mult)  # <= arr_rows
    if block_rows is None:
        block_rows = _pick_block_rows(itemsize)
    block_rows = min(_round_up(block_rows, sub_mult), max_block)

    num_blocks = pl.cdiv(arr_rows, block_rows)
    bpc = pl.cdiv(num_blocks, NUM_SPLITS)                 # blocks per core-split
    need_mask = NUM_SPLITS * bpc * block_rows > rows

    kernel = functools.partial(
        _dsc_sums_kernel, rows_valid=rows, block_rows=block_rows,
        blocks_per_split=bpc, need_mask=need_mask)

    def in_map(c, b):
        # Clamp so a fully-out-of-range logical block (odd split) re-reads the
        # last real block; its contribution is masked to zero in-kernel.
        return (jnp.minimum(c * bpc + b, num_blocks - 1), 0)

    acc_shape = jax.ShapeDtypeStruct((NUM_SPLITS * SUBLANE, LANE), jnp.float32)
    out_specs = tuple(pl.BlockSpec((SUBLANE, LANE), lambda c, b: (c, 0))
                      for _ in range(3))

    block_bytes = block_rows * LANE * itemsize
    vmem_bytes = int(max(2 * 2 * block_bytes + (4 << 20), 32 << 20))

    out_img, out_tgt, out_dot = pl.pallas_call(
        kernel,
        out_shape=(acc_shape, acc_shape, acc_shape),
        grid_spec=pltpu.PrefetchScalarGridSpec(
            num_scalar_prefetch=0,
            grid=(NUM_SPLITS, bpc),
            in_specs=[pl.BlockSpec((block_rows, LANE), in_map),
                      pl.BlockSpec((block_rows, LANE), in_map)],
            out_specs=out_specs,
        ),
        compiler_params=pltpu.CompilerParams(
            dimension_semantics=("parallel", "arbitrary"),
            vmem_limit_bytes=vmem_bytes,
        ),
        cost_estimate=pl.CostEstimate(
            flops=4 * n, transcendentals=0,
            bytes_accessed=2 * n * itemsize + 3 * NUM_SPLITS * SUBLANE * LANE * 4),
    )(img2d, tgt2d)

    # Cross-core reduction + dice formula: tiny scalar work, fused by XLA.
    s_img = jnp.sum(out_img)
    s_tgt = jnp.sum(out_tgt)
    inter = jnp.sum(out_dot)
    nf = jnp.float32(n)
    sm = jnp.float32(smooth)

    union = s_img + s_tgt + sm
    # dot(1-img, 1-target) = N - sum(img) - sum(target) + dot(img, target)
    inter0 = nf - s_img - s_tgt + inter
    # sum(1-img) + sum(1-target) + smooth
    union0 = 2.0 * nf - s_img - s_tgt + sm

    t = (2.0 * inter + sm) / union
    t0 = (2.0 * inter0 + sm) / union0
    return 1.0 - (t + t0) / 2.0


def _dsc_loss_ref(img, target, smooth=1.0):
    img = img.astype(jnp.float32)
    target = target.astype(jnp.float32)
    inter = jnp.dot(img.reshape(-1), target.reshape(-1))
    union = jnp.sum(img) + jnp.sum(target) + smooth
    img0 = 1.0 - img
    tgt0 = 1.0 - target
    inter0 = jnp.dot(img0.reshape(-1), tgt0.reshape(-1))
    union0 = jnp.sum(img0) + jnp.sum(tgt0) + smooth
    t = (2.0 * inter + smooth) / union
    t0 = (2.0 * inter0 + smooth) / union0
    return 1.0 - (t + t0) / 2.0


if __name__ == "__main__":
    key = jax.random.PRNGKey(0)
    k1, k2, k3, k4, k5, k6 = jax.random.split(key, 6)

    # 1) Small aligned case: rows = 8, single block, second core-split fully masked.
    C, H, W = 4, 16, 16
    img = jax.random.uniform(k1, (C, H, W), dtype=jnp.float32)
    target = (jax.random.uniform(k2, (C, H, W)) > 0.5).astype(jnp.float32)
    loss = dsc_loss(img, target, smooth=1.0)
    jax.block_until_ready(loss)
    ref = _dsc_loss_ref(img, target, smooth=1.0)
    assert jnp.allclose(loss, ref, rtol=1e-4, atol=1e-5), (loss, ref)

    # 2) Ragged case: C*H*W = 160000 -> rows = 1250 (not a multiple of 8).
    #    No host pad; ragged block handled by the in-kernel row mask.
    C2, H2, W2 = 4, 200, 200
    img2 = jax.random.uniform(k3, (C2, H2, W2), dtype=jnp.float32)
    target2 = (jax.random.uniform(k4, (C2, H2, W2)) > 0.5).astype(jnp.float32)
    loss2 = dsc_loss(img2, target2, smooth=1.0)
    jax.block_until_ready(loss2)
    ref2 = _dsc_loss_ref(img2, target2, smooth=1.0)
    assert jnp.allclose(loss2, ref2, rtol=1e-4, atol=1e-5), (loss2, ref2)

    # 3) Multi-block grid (forced small blocks): exercises the 2-way core split,
    #    the per-split accumulators, and a clamped out-of-range logical block.
    C3, H3, W3 = 8, 128, 160
    img3 = jax.random.uniform(k5, (C3, H3, W3), dtype=jnp.float32)
    target3 = (jax.random.uniform(k6, (C3, H3, W3)) > 0.5).astype(jnp.float32)
    loss3 = dsc_loss(img3, target3, smooth=1.0, block_rows=256)
    jax.block_until_ready(loss3)
    ref3 = _dsc_loss_ref(img3, target3, smooth=1.0)
    assert jnp.allclose(loss3, ref3, rtol=1e-4, atol=1e-5), (loss3, ref3)

    print("KERNEL_OK")
</pallas_src>

<mosaic_0001>
module attributes {stable_mosaic.version = 11 : i64} {
  func.func @_dsc_sums_kernel(%arg0: i32, %arg1: i32, %arg2: memref<8x128xf32, #tpu.memory_space<vmem>>, %arg3: memref<8x128xf32, #tpu.memory_space<vmem>>, %arg4: memref<8x128xf32, #tpu.memory_space<vmem>>, %arg5: memref<8x128xf32, #tpu.memory_space<vmem>>, %arg6: memref<8x128xf32, #tpu.memory_space<vmem>>) attributes {dimension_semantics = [#tpu.dimension_semantics<parallel>, #tpu.dimension_semantics<arbitrary>], iteration_bounds = array<i64: 2, 1>, scalar_prefetch = 0 : i64, scratch_operands = 0 : i64, tpu.core_type = #tpu.core_type<tc>, window_params = [{transform_indices = @transform_0, window_bounds = array<i64: 8, 128>}, {transform_indices = @transform_1, window_bounds = array<i64: 8, 128>}, {transform_indices = @transform_2, window_bounds = array<i64: 8, 128>}, {transform_indices = @transform_3, window_bounds = array<i64: 8, 128>}, {transform_indices = @transform_4, window_bounds = array<i64: 8, 128>}]} {
    %c0_i32 = arith.constant 0 : i32
    %0 = arith.cmpi eq, %arg1, %c0_i32 : i32
    %1 = arith.extui %0 : i1 to i32
    %c0_i32_0 = arith.constant 0 : i32
    %2 = arith.cmpi ne, %1, %c0_i32_0 : i32
    scf.if %2 {
      %cst = arith.constant 0.000000e+00 : f32
      %13 = vector.broadcast %cst : f32 to vector<8x128xf32>
      %c0 = arith.constant 0 : index
      %c0_5 = arith.constant 0 : index
      %14 = vector.load %arg4[%c0, %c0_5] : memref<8x128xf32, #tpu.memory_space<vmem>>, vector<8x128xf32>
      tpu.vector_store %arg4[%c0, %c0_5], %13 {strides = array<i32>} : memref<8x128xf32, #tpu.memory_space<vmem>>, vector<8x128xf32>,
      %cst_6 = arith.constant 0.000000e+00 : f32
      %15 = vector.broadcast %cst_6 : f32 to vector<8x128xf32>
      %c0_7 = arith.constant 0 : index
      %c0_8 = arith.constant 0 : index
      %16 = vector.load %arg5[%c0_7, %c0_8] : memref<8x128xf32, #tpu.memory_space<vmem>>, vector<8x128xf32>
      tpu.vector_store %arg5[%c0_7, %c0_8], %15 {strides = array<i32>} : memref<8x128xf32, #tpu.memory_space<vmem>>, vector<8x128xf32>,
      %cst_9 = arith.constant 0.000000e+00 : f32
      %17 = vector.broadcast %cst_9 : f32 to vector<8x128xf32>
      %c0_10 = arith.constant 0 : index
      %c0_11 = arith.constant 0 : index
      %18 = vector.load %arg6[%c0_10, %c0_11] : memref<8x128xf32, #tpu.memory_space<vmem>>, vector<8x128xf32>
      tpu.vector_store %arg6[%c0_10, %c0_11], %17 {strides = array<i32>} : memref<8x128xf32, #tpu.memory_space<vmem>>, vector<8x128xf32>,
    } else {
    }
    %c1_i32 = arith.constant 1 : i32
    %3 = arith.muli %arg0, %c1_i32 : i32
    %4 = arith.addi %3, %arg1 : i32
    %c8_i32 = arith.constant 8 : i32
    %5 = arith.muli %4, %c8_i32 : i32
    %c8_i32_1 = arith.constant 8 : i32
    %6 = arith.addi %5, %c8_i32_1 : i32
    %c8_i32_2 = arith.constant 8 : i32
    %7 = arith.cmpi sgt, %6, %c8_i32_2 : i32
    %true = arith.constant true
    %8 = arith.xori %7, %true : i1
    %9 = arith.extui %8 : i1 to i32
    %c0_i32_3 = arith.constant 0 : i32
    %10 = arith.cmpi ne, %9, %c0_i32_3 : i32
    scf.if %10 {
      %cst = arith.constant 0.000000e+00 : f32
      %13 = vector.broadcast %cst : f32 to vector<8x128xf32>
      %c0 = arith.constant 0 : index
      %c0_5 = arith.constant 0 : index
      %14 = vector.load %arg2[%c0, %c0_5] : memref<8x128xf32, #tpu.memory_space<vmem>>, vector<8x128xf32>
      %c0_6 = arith.constant 0 : index
      %c0_7 = arith.constant 0 : index
      %15 = vector.load %arg3[%c0_6, %c0_7] : memref<8x128xf32, #tpu.memory_space<vmem>>, vector<8x128xf32>
      %16 = vector.shape_cast %14 : vector<8x128xf32> to vector<1x8x128xf32>
      %17 = vector.shape_cast %15 : vector<8x128xf32> to vector<1x8x128xf32>
      %cst_8 = arith.constant dense<0.000000e+00> : vector<8x128xf32>
      %18 = vector.multi_reduction <add>, %16, %cst_8 [0] : vector<1x8x128xf32> to vector<8x128xf32>
      %cst_9 = arith.constant dense<0.000000e+00> : vector<8x128xf32>
      %19 = vector.multi_reduction <add>, %17, %cst_9 [0] : vector<1x8x128xf32> to vector<8x128xf32>
      %20 = arith.mulf %16, %17 : vector<1x8x128xf32>
      %cst_10 = arith.constant dense<0.000000e+00> : vector<8x128xf32>
      %21 = vector.multi_reduction <add>, %20, %cst_10 [0] : vector<1x8x128xf32> to vector<8x128xf32>
      %22 = arith.addf %13, %18 : vector<8x128xf32>
      %23 = arith.addf %13, %19 : vector<8x128xf32>
      %24 = arith.addf %13, %21 : vector<8x128xf32>
      %c0_11 = arith.constant 0 : index
      %c0_12 = arith.constant 0 : index
      %25 = vector.load %arg4[%c0_11, %c0_12] : memref<8x128xf32, #tpu.memory_space<vmem>>, vector<8x128xf32>
      %26 = arith.addf %25, %22 : vector<8x128xf32>
      %c0_13 = arith.constant 0 : index
      %c0_14 = arith.constant 0 : index
      %27 = vector.load %arg4[%c0_13, %c0_14] : memref<8x128xf32, #tpu.memory_space<vmem>>, vector<8x128xf32>
      tpu.vector_store %arg4[%c0_13, %c0_14], %26 {strides = array<i32>} : memref<8x128xf32, #tpu.memory_space<vmem>>, vector<8x128xf32>,
      %c0_15 = arith.constant 0 : index
      %c0_16 = arith.constant 0 : index
      %28 = vector.load %arg5[%c0_15, %c0_16] : memref<8x128xf32, #tpu.memory_space<vmem>>, vector<8x128xf32>
      %29 = arith.addf %28, %23 : vector<8x128xf32>
      %c0_17 = arith.constant 0 : index
      %c0_18 = arith.constant 0 : index
      %30 = vector.load %arg5[%c0_17, %c0_18] : memref<8x128xf32, #tpu.memory_space<vmem>>, vector<8x128xf32>
      tpu.vector_store %arg5[%c0_17, %c0_18], %29 {strides = array<i32>} : memref<8x128xf32, #tpu.memory_space<vmem>>, vector<8x128xf32>,
      %c0_19 = arith.constant 0 : index
      %c0_20 = arith.constant 0 : index
      %31 = vector.load %arg6[%c0_19, %c0_20] : memref<8x128xf32, #tpu.memory_space<vmem>>, vector<8x128xf32>
      %32 = arith.addf %31, %24 : vector<8x128xf32>
      %c0_21 = arith.constant 0 : index
      %c0_22 = arith.constant 0 : index
      %33 = vector.load %arg6[%c0_21, %c0_22] : memref<8x128xf32, #tpu.memory_space<vmem>>, vector<8x128xf32>
      tpu.vector_store %arg6[%c0_21, %c0_22], %32 {strides = array<i32>} : memref<8x128xf32, #tpu.memory_space<vmem>>, vector<8x128xf32>,
    } else {
    }
    %11 = arith.extui %7 : i1 to i32
    %c0_i32_4 = arith.constant 0 : i32
    %12 = arith.cmpi ne, %11, %c0_i32_4 : i32
    scf.if %12 {
      %cst = arith.constant 0.000000e+00 : f32
      %13 = vector.broadcast %cst : f32 to vector<8x128xf32>
      %14 = tpu.iota {dimensions = array<i32: 0>} : vector<8x128xi32>
      %c0 = arith.constant 0 : index
      %c0_5 = arith.constant 0 : index
      %15 = vector.load %arg2[%c0, %c0_5] : memref<8x128xf32, #tpu.memory_space<vmem>>, vector<8x128xf32>
      %c0_6 = arith.constant 0 : index
      %c0_7 = arith.constant 0 : index
      %16 = vector.load %arg3[%c0_6, %c0_7] : memref<8x128xf32, #tpu.memory_space<vmem>>, vector<8x128xf32>
      %c0_i32_8 = arith.constant 0 : i32
      %17 = arith.addi %5, %c0_i32_8 : i32
      %18 = vector.broadcast %17 : i32 to vector<8x128xi32>
      %19 = arith.addi %18, %14 : vector<8x128xi32>
      %c8_i32_9 = arith.constant 8 : i32
      %20 = vector.broadcast %c8_i32_9 : i32 to vector<8x128xi32>
      %21 = arith.cmpi slt, %19, %20 : vector<8x128xi32>
      %cst_10 = arith.constant 0.000000e+00 : f32
      %22 = vector.broadcast %cst_10 : f32 to vector<8x128xf32>
      %23 = arith.select %21, %15, %22 : vector<8x128xi1>, vector<8x128xf32>
      %cst_11 = arith.constant 0.000000e+00 : f32
      %24 = vector.broadcast %cst_11 : f32 to vector<8x128xf32>
      %25 = arith.select %21, %16, %24 : vector<8x128xi1>, vector<8x128xf32>
      %26 = vector.shape_cast %23 : vector<8x128xf32> to vector<1x8x128xf32>
      %27 = vector.shape_cast %25 : vector<8x128xf32> to vector<1x8x128xf32>
      %cst_12 = arith.constant dense<0.000000e+00> : vector<8x128xf32>
      %28 = vector.multi_reduction <add>, %26, %cst_12 [0] : vector<1x8x128xf32> to vector<8x128xf32>
      %cst_13 = arith.constant dense<0.000000e+00> : vector<8x128xf32>
      %29 = vector.multi_reduction <add>, %27, %cst_13 [0] : vector<1x8x128xf32> to vector<8x128xf32>
      %30 = arith.mulf %26, %27 : vector<1x8x128xf32>
      %cst_14 = arith.constant dense<0.000000e+00> : vector<8x128xf32>
      %31 = vector.multi_reduction <add>, %30, %cst_14 [0] : vector<1x8x128xf32> to vector<8x128xf32>
      %32 = arith.addf %13, %28 : vector<8x128xf32>
      %33 = arith.addf %13, %29 : vector<8x128xf32>
      %34 = arith.addf %13, %31 : vector<8x128xf32>
      %c0_15 = arith.constant 0 : index
      %c0_16 = arith.constant 0 : index
      %35 = vector.load %arg4[%c0_15, %c0_16] : memref<8x128xf32, #tpu.memory_space<vmem>>, vector<8x128xf32>
      %36 = arith.addf %35, %32 : vector<8x128xf32>
      %c0_17 = arith.constant 0 : index
      %c0_18 = arith.constant 0 : index
      %37 = vector.load %arg4[%c0_17, %c0_18] : memref<8x128xf32, #tpu.memory_space<vmem>>, vector<8x128xf32>
      tpu.vector_store %arg4[%c0_17, %c0_18], %36 {strides = array<i32>} : memref<8x128xf32, #tpu.memory_space<vmem>>, vector<8x128xf32>,
      %c0_19 = arith.constant 0 : index
      %c0_20 = arith.constant 0 : index
      %38 = vector.load %arg5[%c0_19, %c0_20] : memref<8x128xf32, #tpu.memory_space<vmem>>, vector<8x128xf32>
      %39 = arith.addf %38, %33 : vector<8x128xf32>
      %c0_21 = arith.constant 0 : index
      %c0_22 = arith.constant 0 : index
      %40 = vector.load %arg5[%c0_21, %c0_22] : memref<8x128xf32, #tpu.memory_space<vmem>>, vector<8x128xf32>
      tpu.vector_store %arg5[%c0_21, %c0_22], %39 {strides = array<i32>} : memref<8x128xf32, #tpu.memory_space<vmem>>, vector<8x128xf32>,
      %c0_23 = arith.constant 0 : index
      %c0_24 = arith.constant 0 : index
      %41 = vector.load %arg6[%c0_23, %c0_24] : memref<8x128xf32, #tpu.memory_space<vmem>>, vector<8x128xf32>
      %42 = arith.addf %41, %34 : vector<8x128xf32>
      %c0_25 = arith.constant 0 : index
      %c0_26 = arith.constant 0 : index
      %43 = vector.load %arg6[%c0_25, %c0_26] : memref<8x128xf32, #tpu.memory_space<vmem>>, vector<8x128xf32>
      tpu.vector_store %arg6[%c0_25, %c0_26], %42 {strides = array<i32>} : memref<8x128xf32, #tpu.memory_space<vmem>>, vector<8x128xf32>,
    } else {
    }
    return
  }
  func.func @transform_0(%arg0: i32, %arg1: i32) -> (i32, i32) {
    %c1_i32 = arith.constant 1 : i32
    %0 = arith.muli %arg0, %c1_i32 : i32
    %1 = arith.addi %0, %arg1 : i32
    %c0_i32 = arith.constant 0 : i32
    %2 = arith.minsi %1, %c0_i32 : i32
    %c0_i32_0 = arith.constant 0 : i32
    %c0_i32_1 = arith.constant 0 : i32
    return %2, %c0_i32_0 : i32, i32
  }
  func.func @transform_1(%arg0: i32, %arg1: i32) -> (i32, i32) {
    %c1_i32 = arith.constant 1 : i32
    %0 = arith.muli %arg0, %c1_i32 : i32
    %1 = arith.addi %0, %arg1 : i32
    %c0_i32 = arith.constant 0 : i32
    %2 = arith.minsi %1, %c0_i32 : i32
    %c0_i32_0 = arith.constant 0 : i32
    %c0_i32_1 = arith.constant 0 : i32
    return %2, %c0_i32_0 : i32, i32
  }
  func.func @transform_2(%arg0: i32, %arg1: i32) -> (i32, i32) {
    %c0_i32 = arith.constant 0 : i32
    %c0_i32_0 = arith.constant 0 : i32
    return %arg0, %c0_i32 : i32, i32
  }
  func.func @transform_3(%arg0: i32, %arg1: i32) -> (i32, i32) {
    %c0_i32 = arith.constant 0 : i32
    %c0_i32_0 = arith.constant 0 : i32
    return %arg0, %c0_i32 : i32, i32
  }
  func.func @transform_4(%arg0: i32, %arg1: i32) -> (i32, i32) {
    %c0_i32 = arith.constant 0 : i32
    %c0_i32_0 = arith.constant 0 : i32
    return %arg0, %c0_i32 : i32, i32
  }
}

</mosaic_0001>

<llo_original>
// kernel: tpu_custom_call.1
$region0: #{tpu_custom_call.1}
  #allocation0 [shape = 'u32[]', space=smem, size = 0x4, offset = 0x4, fixed_abs, tag = 'smem constant byte address 0x4 - core index']
  #allocation1 [shape = 'u32[72,128]{1,0:T(1,128)}', space=vmem, size = 0x9000, scoped, tag = 'internal scratch']
  %s0 = inlined_call_operand.hbm [shape: f32[8,128], index: 0, kind: input, shape index: {}]
  %s1 = inlined_call_operand.hbm [shape: f32[8,128], index: 1, kind: input, shape index: {}]
  %s2 = inlined_call_operand.hbm [shape: f32[16,128], index: 2, kind: output, shape index: {0}]
  %s3 = inlined_call_operand.hbm [shape: f32[16,128], index: 3, kind: output, shape index: {1}]
  %s4 = inlined_call_operand.hbm [shape: f32[16,128], index: 4, kind: output, shape index: {2}]
  %5 = xla_tuple %s2, %s3, %s4
  %s6 = sld [smem:[#allocation0]]
  $region77: #{tpu_custom_call.1} parent=0
    _
  %s8 = ssub.s32 1, %s6
  %s9 = scalar_select 0, %s8, %s6
  $region1: #{tpu_custom_call.1} parent=0
    #allocation2 [shape = 'u8[8192]{0}', space=vmem, size = 0x2000, scoped, tag = 'input window, operand 0']
    #allocation3 [shape = 's32[2]{0}', space=sflag, size = 0x8, scoped, tag = 'scoped memory for tpu_custom_call.1']
    #allocation4 [shape = 's32[2]{0}', space=sflag, size = 0x8, scoped, tag = 'scoped memory for tpu_custom_call.1']
    #allocation5 [shape = 'u8[8192]{0}', space=vmem, size = 0x2000, scoped, tag = 'input window, operand 1']
    #allocation6 [shape = 's32[2]{0}', space=sflag, size = 0x8, scoped, tag = 'scoped memory for tpu_custom_call.1']
    #allocation7 [shape = 'u8[8192]{0}', space=vmem, size = 0x2000, scoped, tag = 'output window, operand 0']
    #allocation8 [shape = 'u8[8192]{0}', space=vmem, size = 0x2000, scoped, tag = 'output window, operand 1']
    #allocation9 [shape = 's32[2]{0}', space=sflag, size = 0x8, scoped, tag = 'scoped memory for tpu_custom_call.1']
    #allocation10 [shape = 'u8[8192]{0}', space=vmem, size = 0x2000, scoped, tag = 'output window, operand 2']
    %10 = vsyncpa [#allocation3], 0
    %s11 = scalar_lea.sflag [#allocation3], 1
    %12 = vsyncpa %s11, 0
    %13 = vsyncpa [#allocation6], 0
    %s14 = scalar_lea.sflag [#allocation6], 1
    %15 = vsyncpa %s14, 0
    %16 = vsyncpa [#allocation4], 0
    %s17 = scalar_lea.sflag [#allocation4], 1
    %18 = vsyncpa %s17, 0
    %19 = vsyncpa [#allocation9], 0
    %s20 = scalar_lea.sflag [#allocation9], 1
    %21 = vsyncpa %s20, 0
    loop: start=0, step=1, limit=4
    $region2: #{tpu_custom_call.1} parent=1 // loop_pre_header
      _
    $region3: #{tpu_custom_call.1} parent=1 // loop_header
      %s23 = sphi 0, %s27
      %p24 = scmp.ge.s32.totalorder %s23, 4
      %s30 = sphi 0, %s42
      %s31 = sphi 0, %s38
      %s32 = sphi 0, %s30
      %s33 = sphi 0, %s31
      %s34 = sphi 0, %s32
      %s35 = sphi 0, %s33
      %s51 = sphi 0, %s53
      %s54 = sphi 0, %s51
      %s55 = sphi 0, %s54
      %s71 = sphi 0, %s55
      %s83 = sphi 0, %s85
      %s86 = sphi 0, %s83
      %s87 = sphi 0, %s86
      %s103 = sphi 0, %s87
      %s109 = sphi 0, %s111
      %s112 = sphi 0, %s109
      %s113 = sphi 0, %s112
      %s129 = sphi 0, %s113
      %s135 = sphi 0, %s137
      %s138 = sphi 0, %s135
      %s139 = sphi 0, %s138
      %s155 = sphi 0, %s139
      %s161 = sphi 0, %s163
      %s164 = sphi 0, %s161
      %s165 = sphi 0, %s164
      %s181 = sphi 0, %s165
    $region4: #{tpu_custom_call.1} parent=1 // loop_header_branch
      %26 = sbr.rel (%p24) target = $region8
    $region5: #{tpu_custom_call.1} parent=1 // loop_body
      %s28 = ssub.s32 %s23, 1
      %s29 = ssub.s32 %s23, 2
      %s36 = sadd.s32 1, %s31
      %p37 = scmp.ge.s32.totalorder %s36, 1
      %s38 = scalar_select %p37, 0, %s36
      %s39 = sadd.s32 1, %s30
      %s40 = scalar_select %p37, %s39, %s30
      %p41 = scmp.ge.s32.totalorder %s40, 2
      %s42 = scalar_select %p41, 0, %s40
      %s43 = sadd.s32 %s30, %s31
      %p44 = scmp.lt.s32.totalorder %s43, 0
      %s45 = scalar_select %p44, %s43, 0
      %s46 = sadd.s32 %s42, %s38
      %p47 = scmp.lt.s32.totalorder %s46, 0
      %s48 = scalar_select %p47, %s46, 0
      %s49 = ssub.s32 %s45, %s48
      %p50 = scmp.eq.s32.totalorder %s49, 0
      %s52 = sadd.s32 %s51, 1
      %s53 = scalar_select %p50, %s51, %s52
      %p56 = pneg %p50
      %p57 = scmp.eq.s32.totalorder %s23, 1
      %p58 = por %p56, %p57
      %p59 = scmp.ne.s32.totalorder %s51, %s54
      %p60 = scmp.eq.s32.totalorder %s23, 0
      %p61 = por %p59, %p60
      %p62 = scmp.ne.s32.totalorder %s51, %s54
      %p63 = scmp.eq.s32.totalorder %s28, 1
      %p64 = por %p62, %p63
      %p65 = scmp.ne.s32.totalorder %s54, %s55
      %p66 = scmp.eq.s32.totalorder %s28, 0
      %p67 = por %p65, %p66
      %p68 = scmp.ne.s32.totalorder %s54, %s55
      %p69 = scmp.eq.s32.totalorder %s29, 1
      %p70 = por %p68, %p69
      %p72 = scmp.ne.s32.totalorder %s55, %s71
      %p73 = scmp.eq.s32.totalorder %s29, 0
      %p74 = por %p72, %p73
      %s75 = sadd.s32 %s30, %s31
      %p76 = scmp.lt.s32.totalorder %s75, 0
      %s77 = scalar_select %p76, %s75, 0
      %s78 = sadd.s32 %s42, %s38
      %p79 = scmp.lt.s32.totalorder %s78, 0
      %s80 = scalar_select %p79, %s78, 0
      %s81 = ssub.s32 %s77, %s80
      %p82 = scmp.eq.s32.totalorder %s81, 0
      %s84 = sadd.s32 %s83, 1
      %s85 = scalar_select %p82, %s83, %s84
      %p88 = pneg %p82
      %p89 = scmp.eq.s32.totalorder %s23, 1
      %p90 = por %p88, %p89
      %p91 = scmp.ne.s32.totalorder %s83, %s86
      %p92 = scmp.eq.s32.totalorder %s23, 0
      %p93 = por %p91, %p92
      %p94 = scmp.ne.s32.totalorder %s83, %s86
      %p95 = scmp.eq.s32.totalorder %s28, 1
      %p96 = por %p94, %p95
      %p97 = scmp.ne.s32.totalorder %s86, %s87
      %p98 = scmp.eq.s32.totalorder %s28, 0
      %p99 = por %p97, %p98
      %p100 = scmp.ne.s32.totalorder %s86, %s87
      %p101 = scmp.eq.s32.totalorder %s29, 1
      %p102 = por %p100, %p101
      %p104 = scmp.ne.s32.totalorder %s87, %s103
      %p105 = scmp.eq.s32.totalorder %s29, 0
      %p106 = por %p104, %p105
      %s107 = ssub.s32 %s30, %s42
      %p108 = scmp.eq.s32.totalorder %s107, 0
      %s110 = sadd.s32 %s109, 1
      %s111 = scalar_select %p108, %s109, %s110
      %p114 = pneg %p108
      %p115 = scmp.eq.s32.totalorder %s23, 1
      %p116 = por %p114, %p115
      %p117 = scmp.ne.s32.totalorder %s109, %s112
      %p118 = scmp.eq.s32.totalorder %s23, 0
      %p119 = por %p117, %p118
      %p120 = scmp.ne.s32.totalorder %s109, %s112
      %p121 = scmp.eq.s32.totalorder %s28, 1
      %p122 = por %p120, %p121
      %p123 = scmp.ne.s32.totalorder %s112, %s113
      %p124 = scmp.eq.s32.totalorder %s28, 0
      %p125 = por %p123, %p124
      %p126 = scmp.ne.s32.totalorder %s112, %s113
      %p127 = scmp.eq.s32.totalorder %s29, 1
      %p128 = por %p126, %p127
      %p130 = scmp.ne.s32.totalorder %s113, %s129
      %p131 = scmp.eq.s32.totalorder %s29, 0
      %p132 = por %p130, %p131
      %s133 = ssub.s32 %s30, %s42
      %p134 = scmp.eq.s32.totalorder %s133, 0
      %s136 = sadd.s32 %s135, 1
      %s137 = scalar_select %p134, %s135, %s136
      %p140 = pneg %p134
      %p141 = scmp.eq.s32.totalorder %s23, 1
      %p142 = por %p140, %p141
      %p143 = scmp.ne.s32.totalorder %s135, %s138
      %p144 = scmp.eq.s32.totalorder %s23, 0
      %p145 = por %p143, %p144
      %p146 = scmp.ne.s32.totalorder %s135, %s138
      %p147 = scmp.eq.s32.totalorder %s28, 1
      %p148 = por %p146, %p147
      %p149 = scmp.ne.s32.totalorder %s138, %s139
      %p150 = scmp.eq.s32.totalorder %s28, 0
      %p151 = por %p149, %p150
      %p152 = scmp.ne.s32.totalorder %s138, %s139
      %p153 = scmp.eq.s32.totalorder %s29, 1
      %p154 = por %p152, %p153
      %p156 = scmp.ne.s32.totalorder %s139, %s155
      %p157 = scmp.eq.s32.totalorder %s29, 0
      %p158 = por %p156, %p157
      %s159 = ssub.s32 %s30, %s42
      %p160 = scmp.eq.s32.totalorder %s159, 0
      %s162 = sadd.s32 %s161, 1
      %s163 = scalar_select %p160, %s161, %s162
      %p166 = pneg %p160
      %p167 = scmp.eq.s32.totalorder %s23, 1
      %p168 = por %p166, %p167
      %p169 = scmp.ne.s32.totalorder %s161, %s164
      %p170 = scmp.eq.s32.totalorder %s23, 0
      %p171 = por %p169, %p170
      %p172 = scmp.ne.s32.totalorder %s161, %s164
      %p173 = scmp.eq.s32.totalorder %s28, 1
      %p174 = por %p172, %p173
      %p175 = scmp.ne.s32.totalorder %s164, %s165
      %p176 = scmp.eq.s32.totalorder %s28, 0
      %p177 = por %p175, %p176
      %p178 = scmp.ne.s32.totalorder %s164, %s165
      %p179 = scmp.eq.s32.totalorder %s29, 1
      %p180 = por %p178, %p179
      %p182 = scmp.ne.s32.totalorder %s165, %s181
      %p183 = scmp.eq.s32.totalorder %s29, 0
      %p184 = por %p182, %p183
      %p185 = scmp.le.s32.totalorder 1, %s23
      %p186 = scmp.lt.s32.totalorder %s23, 3
      %p187 = pnand %p185, %p186
      %p188 = pneg %p187
      // Predicated region
      $region9: #{tpu_custom_call.1} parent=5 // pred_check
        _
      $region10: #{tpu_custom_call.1} parent=5 // pred_check_branch
        %190 = sbr.rel (%p187) target = $region12
      $region11: #{tpu_custom_call.1} parent=5 // pred_region
        %s191 = ssub.s32 %s23, 1
      $region12: #{tpu_custom_call.1} parent=5 // pred_fallthru
        _
      %p192 = scmp.lt.s32.totalorder %s23, 2
      // Predicated region
      $region13: #{tpu_custom_call.1} parent=5 // pred_check
        %p193 = pneg %p192
      $region14: #{tpu_custom_call.1} parent=5 // pred_check_branch
        %195 = sbr.rel (%p193) target = $region16
      $region15: #{tpu_custom_call.1} parent=5 // pred_region
        // Predicated region
        $region17: #{tpu_custom_call.1} parent=15 // pred_check
          %p196 = pneg %p61
        $region18: #{tpu_custom_call.1} parent=15 // pred_check_branch
          %198 = sbr.rel (%p196) target = $region20
        $region19: #{tpu_custom_call.1} parent=15 // pred_region
          %s199 = sand.u32 %s51, 1
          %s200 = scalar_lea.sflag [#allocation3], %s199
          %s201 = sand.u32 %s51, 1
          %s202 = smul.addr %s201, 8
          %s203 = scalar_lea.vmem [#allocation2], %s202
          %s204 = sadd.s32 %s30, %s31
          %p205 = scmp.lt.s32.totalorder %s204, 0
          %s206 = scalar_select %p205, %s204, 0
          %208 = vsyncadd %s200, 0
          %s209 = smul.addr %s206, 8
          %s210 = scalar_lea.hbm %s0, %s209
          %s212 = sshll.u32 %s210, 4
          %s213 = int_to_ptr.hbm [resolvable:$true] %s212
          %s214 = sshll.u32 %s203, 4
          %s215 = int_to_ptr.vmem [resolvable:$true] %s214
          %217 = dma.hbm_to_vmem [thread:$0]  %s213, 128, %s215, %s200
        $region20: #{tpu_custom_call.1} parent=15 // pred_fallthru
          _
        // Predicated region
        $region21: #{tpu_custom_call.1} parent=15 // pred_check
          %p218 = pneg %p93
        $region22: #{tpu_custom_call.1} parent=15 // pred_check_branch
          %220 = sbr.rel (%p218) target = $region24
        $region23: #{tpu_custom_call.1} parent=15 // pred_region
          %s221 = sand.u32 %s83, 1
          %s222 = scalar_lea.sflag [#allocation6], %s221
          %s223 = sand.u32 %s83, 1
          %s224 = smul.addr %s223, 8
          %s225 = scalar_lea.vmem [#allocation5], %s224
          %s226 = sadd.s32 %s30, %s31
          %p227 = scmp.lt.s32.totalorder %s226, 0
          %s228 = scalar_select %p227, %s226, 0
          %230 = vsyncadd %s222, 0
          %s231 = smul.addr %s228, 8
          %s232 = scalar_lea.hbm %s1, %s231
          %s234 = sshll.u32 %s232, 4
          %s235 = int_to_ptr.hbm [resolvable:$true] %s234
          %s236 = sshll.u32 %s225, 4
          %s237 = int_to_ptr.vmem [resolvable:$true] %s236
          %239 = dma.hbm_to_vmem [thread:$0]  %s235, 128, %s237, %s222
        $region24: #{tpu_custom_call.1} parent=15 // pred_fallthru
          _
      $region16: #{tpu_custom_call.1} parent=5 // pred_fallthru
        _
      %p240 = scmp.le.s32.totalorder 1, %s23
      %p241 = scmp.lt.s32.totalorder %s23, 3
      %p242 = pnand %p240, %p241
      %p243 = pneg %p242
      // Predicated region
      $region25: #{tpu_custom_call.1} parent=5 // pred_check
        _
      $region26: #{tpu_custom_call.1} parent=5 // pred_check_branch
        %245 = sbr.rel (%p242) target = $region28
      $region27: #{tpu_custom_call.1} parent=5 // pred_region
        %s246 = ssub.s32 %s23, 1
        %s247 = sand.u32 %s54, 1
        %s248 = scalar_lea.sflag [#allocation3], %s247
        %s249 = sand.u32 %s54, 1
        %s250 = smul.addr %s249, 8
        %s251 = scalar_lea.vmem [#allocation2], %s250
        // Predicated region
        $region29: #{tpu_custom_call.1} parent=27 // pred_check
          %p252 = pneg %p67
        $region30: #{tpu_custom_call.1} parent=27 // pred_check_branch
          %254 = sbr.rel (%p252) target = $region32
        $region31: #{tpu_custom_call.1} parent=27 // pred_region
          %256 = dma.done %s248, 128
        $region32: #{tpu_custom_call.1} parent=27 // pred_fallthru
          _
        %s257 = sand.u32 %s86, 1
        %s258 = scalar_lea.sflag [#allocation6], %s257
        %s259 = sand.u32 %s86, 1
        %s260 = smul.addr %s259, 8
        %s261 = scalar_lea.vmem [#allocation5], %s260
        // Predicated region
        $region33: #{tpu_custom_call.1} parent=27 // pred_check
          %p262 = pneg %p99
        $region34: #{tpu_custom_call.1} parent=27 // pred_check_branch
          %264 = sbr.rel (%p262) target = $region36
        $region35: #{tpu_custom_call.1} parent=27 // pred_region
          %266 = dma.done %s258, 128
        $region36: #{tpu_custom_call.1} parent=27 // pred_fallthru
          _
        %s267 = sand.u32 %s54, 1
        %s268 = scalar_lea.sflag [#allocation3], %s267
        %s269 = sand.u32 %s54, 1
        %s270 = smul.addr %s269, 8
        %s271 = scalar_lea.vmem [#allocation2], %s270
        %p272 = pneg %p67
        %p273 = pneg %p64
        %s274 = sand.u32 %s86, 1
        %s275 = scalar_lea.sflag [#allocation6], %s274
        %s276 = sand.u32 %s86, 1
        %s277 = smul.addr %s276, 8
        %s278 = scalar_lea.vmem [#allocation5], %s277
        %p279 = pneg %p99
        %p280 = pneg %p96
        %p281 = pneg %p125
        %p282 = pneg %p122
        %s283 = sand.u32 %s112, 1
        %s284 = scalar_lea.sflag [#allocation4], %s283
        %s285 = sand.u32 %s112, 1
        %s286 = smul.addr %s285, 8
        %s287 = scalar_lea.vmem [#allocation7], %s286
        %p288 = pneg %p151
        %p289 = pneg %p148
        %s290 = sand.u32 %s28, 1
        %s291 = scalar_lea.sflag [#allocation9], %s290
        %s292 = sand.u32 %s138, 1
        %s293 = smul.addr %s292, 8
        %s294 = scalar_lea.vmem [#allocation8], %s293
        %p295 = pneg %p177
        %p296 = pneg %p174
        %s297 = sand.u32 %s28, 1
        %s298 = scalar_lea.sflag [#allocation9], %s297
        %s299 = sand.u32 %s164, 1
        %s300 = smul.addr %s299, 8
        %s301 = scalar_lea.vmem [#allocation10], %s300
        %s302 = sadd.s32 %s32, %s33
        %p303 = scmp.lt.s32.totalorder %s302, 0
        %s304 = scalar_select %p303, %s302, 0
        %s305 = sadd.s32 %s32, %s33
        %p306 = scmp.lt.s32.totalorder %s305, 0
        %s307 = scalar_select %p306, %s305, 0
        %p308 = scmp.eq.s32.totalorder %s33, 0
        // Predicated region
        $region37: #{tpu_custom_call.1} parent=27 // pred_check
          %p309 = pneg %p308
        $region38: #{tpu_custom_call.1} parent=27 // pred_check_branch
          %311 = sbr.rel (%p309) target = $region40
        $region39: #{tpu_custom_call.1} parent=27 // pred_region
          %312 = vst [vmem:[%s287] sm:$0xff] 0.0
          %313 = vst [vmem:[%s294] sm:$0xff] 0.0
          %314 = vst [vmem:[%s301] sm:$0xff] 0.0
        $region40: #{tpu_custom_call.1} parent=27 // pred_fallthru
          _
        %s315 = sadd.s32 %s32, %s33
        %s316 = smul.u32 %s315, 8
        %s317 = sadd.s32 %s316, 8
        %p318 = scmp.gt.s32.totalorder %s317, 8
        %p319 = scmp.le.s32.totalorder %s317, 8
        // Predicated region
        $region41: #{tpu_custom_call.1} parent=27 // pred_check
          %p320 = pneg %p319
        $region42: #{tpu_custom_call.1} parent=27 // pred_check_branch
          %322 = sbr.rel (%p320) target = $region44
        $region43: #{tpu_custom_call.1} parent=27 // pred_region
          %v323 = vld [vmem:[%s251] sm:$0xff]
          %v324 = vld [vmem:[%s261] sm:$0xff]
          %v325 = vadd.f32 %v323, 0.0
          %v326 = vadd.f32 %v324, 0.0
          %v327 = vmul.f32 %v323, %v324
          %v328 = vadd.f32 %v327, 0.0
          %v329 = vadd.f32 %v325, 0.0
          %v330 = vadd.f32 %v326, 0.0
          %v331 = vadd.f32 %v328, 0.0
          %v332 = vld [vmem:[%s287] sm:$0xff]
          %v333 = vadd.f32 %v332, %v329
          %334 = vst [vmem:[%s287] sm:$0xff] %v333
          %v335 = vld [vmem:[%s294] sm:$0xff]
          %v336 = vadd.f32 %v335, %v330
          %337 = vst [vmem:[%s294] sm:$0xff] %v336
          %v338 = vld [vmem:[%s301] sm:$0xff]
          %v339 = vadd.f32 %v338, %v331
          %340 = vst [vmem:[%s301] sm:$0xff] %v339
        $region44: #{tpu_custom_call.1} parent=27 // pred_fallthru
          _
        // Predicated region
        $region45: #{tpu_custom_call.1} parent=27 // pred_check
          %p341 = pneg %p318
        $region46: #{tpu_custom_call.1} parent=27 // pred_check_branch
          %343 = sbr.rel (%p341) target = $region48
        $region47: #{tpu_custom_call.1} parent=27 // pred_region
          %v344 = vlaneseq
          %v345 = vshrl.u32 %v344, 7
          %v346 = vld [vmem:[%s251] sm:$0xff]
          %v347 = vld [vmem:[%s261] sm:$0xff]
          %v348 = vstv %s316
          %v349 = vadd.s32 %v348, %v345
          %vm350 = vcmp.lt.s32.totalorder %v349, 8
          %v351 = vsel %vm350, %v346, 0.0
          %v352 = vsel %vm350, %v347, 0.0
          %v353 = vadd.f32 %v351, 0.0
          %v354 = vadd.f32 %v352, 0.0
          %v355 = vmul.f32 %v351, %v352
          %v356 = vadd.f32 %v355, 0.0
          %v357 = vadd.f32 %v353, 0.0
          %v358 = vadd.f32 %v354, 0.0
          %v359 = vadd.f32 %v356, 0.0
          %v360 = vld [vmem:[%s287] sm:$0xff]
          %v361 = vadd.f32 %v360, %v357
          %362 = vst [vmem:[%s287] sm:$0xff] %v361
          %v363 = vld [vmem:[%s294] sm:$0xff]
          %v364 = vadd.f32 %v363, %v358
          %365 = vst [vmem:[%s294] sm:$0xff] %v364
          %v366 = vld [vmem:[%s301] sm:$0xff]
          %v367 = vadd.f32 %v366, %v359
          %368 = vst [vmem:[%s301] sm:$0xff] %v367
        $region48: #{tpu_custom_call.1} parent=27 // pred_fallthru
          _
        %s369 = sand.u32 %s112, 1
        %s370 = scalar_lea.sflag [#allocation4], %s369
        %s371 = sand.u32 %s112, 1
        %s372 = smul.addr %s371, 8
        %s373 = scalar_lea.vmem [#allocation7], %s372
        %s374 = sand.u32 %s28, 1
        %s375 = scalar_lea.sflag [#allocation9], %s374
        %s376 = sand.u32 %s138, 1
        %s377 = smul.addr %s376, 8
        %s378 = scalar_lea.vmem [#allocation8], %s377
        %s379 = sand.u32 %s28, 1
        %s380 = scalar_lea.sflag [#allocation9], %s379
        %s381 = sand.u32 %s164, 1
        %s382 = smul.addr %s381, 8
        %s383 = scalar_lea.vmem [#allocation10], %s382
        // Predicated region
        $region49: #{tpu_custom_call.1} parent=27 // pred_check
          %p384 = pneg %p122
        $region50: #{tpu_custom_call.1} parent=27 // pred_check_branch
          %386 = sbr.rel (%p384) target = $region52
        $region51: #{tpu_custom_call.1} parent=27 // pred_region
          %388 = vsyncadd %s370, 0
          %s389 = smul.addr %s32, 8
          %s390 = scalar_lea.hbm %s2, %s389
          %s392 = sshll.u32 %s373, 4
          %s393 = int_to_ptr.vmem [resolvable:$true] %s392
          %s394 = sshll.u32 %s390, 4
          %s395 = int_to_ptr.hbm [resolvable:$true] %s394
          %397 = dma.vmem_to_hbm [thread:$0]  %s393, 128, %s395, %s370
        $region52: #{tpu_custom_call.1} parent=27 // pred_fallthru
          _
        // Predicated region
        $region53: #{tpu_custom_call.1} parent=27 // pred_check
          %p398 = pneg %p148
        $region54: #{tpu_custom_call.1} parent=27 // pred_check_branch
          %400 = sbr.rel (%p398) target = $region56
        $region55: #{tpu_custom_call.1} parent=27 // pred_region
          %402 = vsyncadd %s375, 0
          %s403 = smul.addr %s32, 8
          %s404 = scalar_lea.hbm %s3, %s403
          %s406 = sshll.u32 %s378, 4
          %s407 = int_to_ptr.vmem [resolvable:$true] %s406
          %s408 = sshll.u32 %s404, 4
          %s409 = int_to_ptr.hbm [resolvable:$true] %s408
          %411 = dma.vmem_to_hbm [thread:$0]  %s407, 128, %s409, %s375
        $region56: #{tpu_custom_call.1} parent=27 // pred_fallthru
          _
        // Predicated region
        $region57: #{tpu_custom_call.1} parent=27 // pred_check
          %p412 = pneg %p174
        $region58: #{tpu_custom_call.1} parent=27 // pred_check_branch
          %414 = sbr.rel (%p412) target = $region60
        $region59: #{tpu_custom_call.1} parent=27 // pred_region
          %416 = vsyncadd %s380, 0
          %s417 = smul.addr %s32, 8
          %s418 = scalar_lea.hbm %s4, %s417
          %s420 = sshll.u32 %s383, 4
          %s421 = int_to_ptr.vmem [resolvable:$true] %s420
          %s422 = sshll.u32 %s418, 4
          %s423 = int_to_ptr.hbm [resolvable:$true] %s422
          %425 = dma.vmem_to_hbm [thread:$0]  %s421, 128, %s423, %s380
        $region60: #{tpu_custom_call.1} parent=27 // pred_fallthru
          _
      $region28: #{tpu_custom_call.1} parent=5 // pred_fallthru
        _
      %p426 = scmp.le.s32.totalorder 2, %s23
      // Predicated region
      $region61: #{tpu_custom_call.1} parent=5 // pred_check
        %p427 = pneg %p426
      $region62: #{tpu_custom_call.1} parent=5 // pred_check_branch
        %429 = sbr.rel (%p427) target = $region64
      $region63: #{tpu_custom_call.1} parent=5 // pred_region
        %s430 = ssub.s32 %s23, 2
        // Predicated region
        $region65: #{tpu_custom_call.1} parent=63 // pred_check
          %p431 = pneg %p128
        $region66: #{tpu_custom_call.1} parent=63 // pred_check_branch
          %433 = sbr.rel (%p431) target = $region68
        $region67: #{tpu_custom_call.1} parent=63 // pred_region
          %s434 = sand.u32 %s113, 1
          %s435 = scalar_lea.sflag [#allocation4], %s434
          %s436 = sand.u32 %s113, 1
          %s437 = smul.addr %s436, 8
          %s438 = scalar_lea.vmem [#allocation7], %s437
          %440 = dma.done %s435, 128
        $region68: #{tpu_custom_call.1} parent=63 // pred_fallthru
          _
        // Predicated region
        $region69: #{tpu_custom_call.1} parent=63 // pred_check
          %p441 = pneg %p154
        $region70: #{tpu_custom_call.1} parent=63 // pred_check_branch
          %443 = sbr.rel (%p441) target = $region72
        $region71: #{tpu_custom_call.1} parent=63 // pred_region
          %s444 = sand.u32 %s29, 1
          %s445 = scalar_lea.sflag [#allocation9], %s444
          %s446 = sand.u32 %s139, 1
          %s447 = smul.addr %s446, 8
          %s448 = scalar_lea.vmem [#allocation8], %s447
          %450 = dma.done %s445, 128
        $region72: #{tpu_custom_call.1} parent=63 // pred_fallthru
          _
        // Predicated region
        $region73: #{tpu_custom_call.1} parent=63 // pred_check
          %p451 = pneg %p180
        $region74: #{tpu_custom_call.1} parent=63 // pred_check_branch
          %453 = sbr.rel (%p451) target = $region76
        $region75: #{tpu_custom_call.1} parent=63 // pred_region
          %s454 = sand.u32 %s29, 1
          %s455 = scalar_lea.sflag [#allocation9], %s454
          %s456 = sand.u32 %s165, 1
          %s457 = smul.addr %s456, 8
          %s458 = scalar_lea.vmem [#allocation10], %s457
          %460 = dma.done %s455, 128
        $region76: #{tpu_custom_call.1} parent=63 // pred_fallthru
          _
      $region64: #{tpu_custom_call.1} parent=5 // pred_fallthru
        _
    $region6: #{tpu_custom_call.1} parent=1 // loop_footer
      %s27 = sadd.s32 1, %s23
    $region7: #{tpu_custom_call.1} parent=1 // loop_footer_branch
      %22 = sbr.rel target = $region3
    $region8: #{tpu_custom_call.1} parent=1 // loop_exit
      _
    %461 = vsyncpa [#allocation3], 1
    %s462 = scalar_lea.sflag [#allocation3], 1
    %463 = vsyncpa %s462, 1
    %464 = vsyncpa [#allocation6], 1
    %s465 = scalar_lea.sflag [#allocation6], 1
    %466 = vsyncpa %s465, 1
    %467 = vsyncpa [#allocation4], 1
    %s468 = scalar_lea.sflag [#allocation4], 1
    %469 = vsyncpa %s468, 1
    %470 = vsyncpa [#allocation9], 1
    %s471 = scalar_lea.sflag [#allocation9], 1
    %472 = vsyncpa %s471, 1

</llo_original>
